<compile_context>
chip_gen: v5e
topology: v5e:2x2
jax: 0.10.0
libtpu: 0.0.40
codegen_flags: <defaults>
</compile_context>

<pallas_src>
import jax
import jax.numpy as jnp
from jax.experimental import pallas as pl
from jax.experimental.pallas import tpu as pltpu

GAMMA = 1.5
ALPHA = 0.25
_LANES = 128
_SUBLANES = 8


def _qfocal_kernel(pred_ref, true_ref, out_ref, acc_ref):
    s = pl.program_id(1)  # reduction axis (innermost)

    @pl.when(s == 0)
    def _():
        acc_ref[...] = jnp.zeros_like(acc_ref)

    p = pred_ref[...].astype(jnp.float32)
    t = true_ref[...].astype(jnp.float32)

    # Single EUP exp per element, reused for BCE and sigmoid.
    e = jnp.exp(-jnp.abs(p))
    # Numerically stable BCE-with-logits: max(p,0) - p*t + log1p(exp(-|p|))
    bce = jnp.maximum(p, 0.0) - p * t + jnp.log1p(e)
    # Stable sigmoid from the same exp:  p>=0 -> 1/(1+e) ;  p<0 -> e/(1+e)
    inv = 1.0 / (1.0 + e)
    sig = jnp.where(p >= 0.0, inv, e * inv)

    alpha_factor = t * ALPHA + (1.0 - t) * (1.0 - ALPHA)
    m = jnp.abs(t - sig)
    modulating_factor = m * jnp.sqrt(m)  # |true - sigmoid(pred)| ** 1.5

    loss = bce * alpha_factor * modulating_factor

    # Lane-resident partial sum: collapse row groups with pure VPU adds
    # (no per-step cross-lane reduce through the XLU).
    rows = loss.shape[0]
    acc_ref[...] += loss.reshape(rows // _SUBLANES, _SUBLANES, _LANES).sum(axis=0)

    @pl.when(s == pl.num_programs(1) - 1)
    def _():
        out_ref[0] = acc_ref[...]


def qfocal_loss(pred, true, *, block_rows=1024, num_cores=1, reduction="mean"):
    """QFocalLoss with mean/sum reduction.

    block_rows: row-tile size (multiple of 8); 512-2048 saturates HBM on v5e/v6e/v7x.
    num_cores : set 2 on v7x to shard row blocks across both TensorCores.
    """
    assert pred.shape == true.shape
    total = pred.size

    pf = pred.reshape(-1)
    tf = true.reshape(-1)

    # Lane-dense 2D layout: (rows, 128). Pick the tile, then pad rows so that the
    # grid divides evenly across (num_cores, steps).
    raw_rows = (total + _LANES - 1) // _LANES
    tile_rows = min(block_rows, ((raw_rows + _SUBLANES - 1) // _SUBLANES) * _SUBLANES)
    tile_rows = max(_SUBLANES, (tile_rows // _SUBLANES) * _SUBLANES)
    chunk = tile_rows * num_cores
    rows = ((raw_rows + chunk - 1) // chunk) * chunk
    steps = rows // chunk

    pad = rows * _LANES - total
    if pad:
        # pred=-1e4, true=0 contributes exactly zero loss (exp(-1e4)==0, sigmoid==0).
        pf = jnp.concatenate([pf, jnp.full((pad,), -1e4, dtype=pf.dtype)])
        tf = jnp.concatenate([tf, jnp.zeros((pad,), dtype=tf.dtype)])

    p2 = pf.reshape(rows, _LANES)
    t2 = tf.reshape(rows, _LANES)

    partials = pl.pallas_call(
        _qfocal_kernel,
        out_shape=jax.ShapeDtypeStruct((num_cores, _SUBLANES, _LANES), jnp.float32),
        grid_spec=pltpu.PrefetchScalarGridSpec(
            num_scalar_prefetch=0,
            grid=(num_cores, steps),
            in_specs=[
                pl.BlockSpec((tile_rows, _LANES), lambda c, s: (c * steps + s, 0)),
                pl.BlockSpec((tile_rows, _LANES), lambda c, s: (c * steps + s, 0)),
            ],
            out_specs=pl.BlockSpec((1, _SUBLANES, _LANES), lambda c, s: (c, 0, 0)),
            scratch_shapes=[pltpu.VMEM((_SUBLANES, _LANES), jnp.float32)],
        ),
        compiler_params=pltpu.CompilerParams(
            dimension_semantics=("parallel", "arbitrary"),
        ),
    )(p2, t2)

    total_sum = jnp.sum(partials)  # tiny final cross-lane reduce outside the kernel
    if reduction == "mean":
        return total_sum / total
    if reduction == "sum":
        return total_sum
    # TODO(synk): reduction='none' (elementwise output) not implemented in this kernel.
    raise NotImplementedError("reduction='none' not supported by this Pallas kernel")


def qfocal_loss_ref(pred, true):
    p = pred.astype(jnp.float32)
    t = true.astype(jnp.float32)
    bce = jnp.maximum(p, 0.0) - p * t + jnp.log1p(jnp.exp(-jnp.abs(p)))
    prob = jax.nn.sigmoid(p)
    af = t * ALPHA + (1.0 - t) * (1.0 - ALPHA)
    mf = jnp.abs(t - prob) ** GAMMA
    return jnp.mean(bce * af * mf)


if __name__ == "__main__":
    key = jax.random.PRNGKey(0)
    k1, k2 = jax.random.split(key)
    # NCHW inputs, matching a typical conv-head logit map
    pred = jax.random.normal(k1, (2, 4, 16, 16), dtype=jnp.float32)
    true = (jax.random.uniform(k2, (2, 4, 16, 16)) > 0.5).astype(jnp.float32)

    out = qfocal_loss(pred, true)
    out = jax.block_until_ready(out)

    ref = qfocal_loss_ref(pred, true)
    assert jnp.allclose(out, ref, rtol=1e-5, atol=1e-6), (out, ref)
    print("KERNEL_OK")
</pallas_src>

<mosaic_0001>
module attributes {stable_mosaic.version = 11 : i64} {
  func.func @_qfocal_kernel(%arg0: i32, %arg1: i32, %arg2: memref<16x128xf32, #tpu.memory_space<vmem>>, %arg3: memref<16x128xf32, #tpu.memory_space<vmem>>, %arg4: memref<1x8x128xf32, #tpu.memory_space<vmem>>, %arg5: memref<8x128xf32, #tpu.memory_space<vmem>>) attributes {dimension_semantics = [#tpu.dimension_semantics<parallel>, #tpu.dimension_semantics<arbitrary>], iteration_bounds = array<i64: 1, 1>, scalar_prefetch = 0 : i64, scratch_operands = 1 : i64, tpu.core_type = #tpu.core_type<tc>, window_params = [{transform_indices = @transform_0, window_bounds = array<i64: 16, 128>}, {transform_indices = @transform_1, window_bounds = array<i64: 16, 128>}, {transform_indices = @transform_2, window_bounds = array<i64: 1, 8, 128>}]} {
    %c0_i32 = arith.constant 0 : i32
    %0 = arith.cmpi eq, %arg1, %c0_i32 : i32
    %1 = arith.extui %0 : i1 to i32
    %c0_i32_0 = arith.constant 0 : i32
    %2 = arith.cmpi ne, %1, %c0_i32_0 : i32
    scf.if %2 {
      %cst_18 = arith.constant 0.000000e+00 : f32
      %44 = vector.broadcast %cst_18 : f32 to vector<8x128xf32>
      %c0_19 = arith.constant 0 : index
      %c0_20 = arith.constant 0 : index
      %45 = vector.load %arg5[%c0_19, %c0_20] : memref<8x128xf32, #tpu.memory_space<vmem>>, vector<8x128xf32>
      tpu.vector_store %arg5[%c0_19, %c0_20], %44 {strides = array<i32>} : memref<8x128xf32, #tpu.memory_space<vmem>>, vector<8x128xf32>,
    } else {
    }
    %c0 = arith.constant 0 : index
    %c0_1 = arith.constant 0 : index
    %3 = vector.load %arg2[%c0, %c0_1] : memref<16x128xf32, #tpu.memory_space<vmem>>, vector<16x128xf32>
    %c0_2 = arith.constant 0 : index
    %c0_3 = arith.constant 0 : index
    %4 = vector.load %arg3[%c0_2, %c0_3] : memref<16x128xf32, #tpu.memory_space<vmem>>, vector<16x128xf32>
    %5 = math.absf %3 : vector<16x128xf32>
    %cst = arith.constant 0.000000e+00 : f32
    %6 = vector.broadcast %cst : f32 to vector<16x128xf32>
    %7 = arith.subf %6, %5 : vector<16x128xf32>
    %8 = math.exp %7 : vector<16x128xf32>
    %cst_4 = arith.constant 0.000000e+00 : f32
    %9 = vector.broadcast %cst_4 : f32 to vector<16x128xf32>
    %10 = arith.maximumf %3, %9 : vector<16x128xf32>
    %11 = arith.mulf %3, %4 : vector<16x128xf32>
    %12 = arith.subf %10, %11 : vector<16x128xf32>
    %13 = math.log1p %8 : vector<16x128xf32>
    %14 = arith.addf %12, %13 : vector<16x128xf32>
    %cst_5 = arith.constant 1.000000e+00 : f32
    %15 = vector.broadcast %cst_5 : f32 to vector<16x128xf32>
    %16 = arith.addf %15, %8 : vector<16x128xf32>
    %cst_6 = arith.constant 1.000000e+00 : f32
    %17 = vector.broadcast %cst_6 : f32 to vector<16x128xf32>
    %18 = arith.divf %17, %16 : vector<16x128xf32>
    %cst_7 = arith.constant 0.000000e+00 : f32
    %19 = vector.broadcast %cst_7 : f32 to vector<16x128xf32>
    %20 = arith.cmpf oge, %3, %19 : vector<16x128xf32>
    %21 = arith.mulf %8, %18 : vector<16x128xf32>
    %22 = arith.select %20, %18, %21 : vector<16x128xi1>, vector<16x128xf32>
    %cst_8 = arith.constant 2.500000e-01 : f32
    %23 = vector.broadcast %cst_8 : f32 to vector<16x128xf32>
    %24 = arith.mulf %4, %23 : vector<16x128xf32>
    %cst_9 = arith.constant 1.000000e+00 : f32
    %25 = vector.broadcast %cst_9 : f32 to vector<16x128xf32>
    %26 = arith.subf %25, %4 : vector<16x128xf32>
    %cst_10 = arith.constant 7.500000e-01 : f32
    %27 = vector.broadcast %cst_10 : f32 to vector<16x128xf32>
    %28 = arith.mulf %26, %27 : vector<16x128xf32>
    %29 = arith.addf %24, %28 : vector<16x128xf32>
    %30 = arith.subf %4, %22 : vector<16x128xf32>
    %31 = math.absf %30 : vector<16x128xf32>
    %32 = math.sqrt %31 : vector<16x128xf32>
    %33 = arith.mulf %31, %32 : vector<16x128xf32>
    %34 = arith.mulf %14, %29 : vector<16x128xf32>
    %35 = arith.mulf %34, %33 : vector<16x128xf32>
    %c0_11 = arith.constant 0 : index
    %c0_12 = arith.constant 0 : index
    %36 = vector.load %arg5[%c0_11, %c0_12] : memref<8x128xf32, #tpu.memory_space<vmem>>, vector<8x128xf32>
    %37 = vector.shape_cast %35 : vector<16x128xf32> to vector<2x8x128xf32>
    %cst_13 = arith.constant dense<0.000000e+00> : vector<8x128xf32>
    %38 = vector.multi_reduction <add>, %37, %cst_13 [0] : vector<2x8x128xf32> to vector<8x128xf32>
    %39 = arith.addf %36, %38 : vector<8x128xf32>
    %c0_14 = arith.constant 0 : index
    %c0_15 = arith.constant 0 : index
    %40 = vector.load %arg5[%c0_14, %c0_15] : memref<8x128xf32, #tpu.memory_space<vmem>>, vector<8x128xf32>
    tpu.vector_store %arg5[%c0_14, %c0_15], %39 {strides = array<i32>} : memref<8x128xf32, #tpu.memory_space<vmem>>, vector<8x128xf32>,
    %c0_i32_16 = arith.constant 0 : i32
    %41 = arith.cmpi eq, %arg1, %c0_i32_16 : i32
    %42 = arith.extui %41 : i1 to i32
    %c0_i32_17 = arith.constant 0 : i32
    %43 = arith.cmpi ne, %42, %c0_i32_17 : i32
    scf.if %43 {
      %c0_18 = arith.constant 0 : index
      %c0_19 = arith.constant 0 : index
      %44 = vector.load %arg5[%c0_18, %c0_19] : memref<8x128xf32, #tpu.memory_space<vmem>>, vector<8x128xf32>
      %c0_20 = arith.constant 0 : index
      %c0_21 = arith.constant 0 : index
      %c0_22 = arith.constant 0 : index
      %45 = vector.load %arg4[%c0_20, %c0_21, %c0_22] : memref<1x8x128xf32, #tpu.memory_space<vmem>>, vector<1x8x128xf32>
      %46 = vector.shape_cast %45 : vector<1x8x128xf32> to vector<8x128xf32>
      %47 = vector.shape_cast %44 : vector<8x128xf32> to vector<1x8x128xf32>
      tpu.vector_store %arg4[%c0_20, %c0_21, %c0_22], %47 {strides = array<i32>} : memref<1x8x128xf32, #tpu.memory_space<vmem>>, vector<1x8x128xf32>,
    } else {
    }
    return
  }
  func.func @transform_0(%arg0: i32, %arg1: i32) -> (i32, i32) {
    %c1_i32 = arith.constant 1 : i32
    %0 = arith.muli %arg0, %c1_i32 : i32
    %1 = arith.addi %0, %arg1 : i32
    %c0_i32 = arith.constant 0 : i32
    %c0_i32_0 = arith.constant 0 : i32
    return %1, %c0_i32 : i32, i32
  }
  func.func @transform_1(%arg0: i32, %arg1: i32) -> (i32, i32) {
    %c1_i32 = arith.constant 1 : i32
    %0 = arith.muli %arg0, %c1_i32 : i32
    %1 = arith.addi %0, %arg1 : i32
    %c0_i32 = arith.constant 0 : i32
    %c0_i32_0 = arith.constant 0 : i32
    return %1, %c0_i32 : i32, i32
  }
  func.func @transform_2(%arg0: i32, %arg1: i32) -> (i32, i32, i32) {
    %c0_i32 = arith.constant 0 : i32
    %c0_i32_0 = arith.constant 0 : i32
    %c0_i32_1 = arith.constant 0 : i32
    return %arg0, %c0_i32, %c0_i32_0 : i32, i32, i32
  }
}

</mosaic_0001>

<llo_original>
// kernel: tpu_custom_call.1
$region0: #{tpu_custom_call.1}
  #allocation0 [shape = 'u32[]', space=smem, size = 0x4, offset = 0x4, fixed_abs, tag = 'smem constant byte address 0x4 - core index']
  #allocation1 [shape = 'u32[72,128]{1,0:T(1,128)}', space=vmem, size = 0x9000, scoped, tag = 'internal scratch']
  #allocation2 [shape = 'f32[8,128]{1,0:T(8,128)}', space=vmem, size = 0x1000, scoped, tag = 'scratch operand']
  %s0 = inlined_call_operand.hbm [shape: f32[16,128], index: 0, kind: input, shape index: {}]
  %s1 = inlined_call_operand.hbm [shape: f32[16,128], index: 1, kind: input, shape index: {}]
  %s2 = inlined_call_operand.hbm [shape: f32[1,8,128], index: 2, kind: output, shape index: {}]
  %s3 = sld [smem:[#allocation0]]
  $region34: #{tpu_custom_call.1} parent=0
    _
  %s5 = ssub.s32 1, %s3
  %s6 = scalar_select 0, %s5, %s3
  $region1: #{tpu_custom_call.1} parent=0
    #allocation3 [shape = 'u8[8192]{0}', space=vmem, size = 0x2000, scoped, tag = 'input window, operand 0, single buffered']
    #allocation4 [shape = 's32[1]{0}', space=sflag, size = 0x4, scoped, tag = 'scoped memory for tpu_custom_call.1']
    #allocation5 [shape = 's32[1]{0}', space=sflag, size = 0x4, scoped, tag = 'scoped memory for tpu_custom_call.1']
    #allocation6 [shape = 'u8[8192]{0}', space=vmem, size = 0x2000, scoped, tag = 'input window, operand 1, single buffered']
    #allocation7 [shape = 's32[1]{0}', space=sflag, size = 0x4, scoped, tag = 'scoped memory for tpu_custom_call.1']
    #allocation8 [shape = 'u8[4096]{0}', space=vmem, size = 0x1000, scoped, tag = 'output window, operand 0, single buffered']
    %7 = vsyncpa [#allocation4], 0
    %8 = vsyncpa [#allocation7], 0
    %9 = vsyncpa [#allocation5], 0
    // Predicated region
    $region2: #{tpu_custom_call.1} parent=1 // pred_check
      _
    $region3: #{tpu_custom_call.1} parent=1 // pred_check_branch
      %11 = sbr.rel (0) target = $region5
    $region4: #{tpu_custom_call.1} parent=1 // pred_region
      %s12 = sadd.s32 0, 0
      %s13 = smul.u32 2, %s12
      %15 = vsyncadd [#allocation4], 0
      %s16 = smul.addr %s13, 8
      %s17 = scalar_lea.hbm %s0, %s16
      %s18 = sshll.u32 %s17, 4
      %s19 = int_to_ptr.hbm [resolvable:$true] %s18
      %s20 = sshll.u32 [#allocation3], 4
      %s21 = int_to_ptr.vmem [resolvable:$true] %s20
      %26 = dma.hbm_to_vmem [thread:$0]  %s19, 256, %s21, [#allocation4], 128, 128, 8
    $region5: #{tpu_custom_call.1} parent=1 // pred_fallthru
      _
    // Predicated region
    $region6: #{tpu_custom_call.1} parent=1 // pred_check
      _
    $region7: #{tpu_custom_call.1} parent=1 // pred_check_branch
      %28 = sbr.rel (0) target = $region9
    $region8: #{tpu_custom_call.1} parent=1 // pred_region
      %s29 = sadd.s32 0, 0
      %s30 = smul.u32 2, %s29
      %32 = vsyncadd [#allocation7], 0
      %s33 = smul.addr %s30, 8
      %s34 = scalar_lea.hbm %s1, %s33
      %s35 = sshll.u32 %s34, 4
      %s36 = int_to_ptr.hbm [resolvable:$true] %s35
      %s37 = sshll.u32 [#allocation6], 4
      %s38 = int_to_ptr.vmem [resolvable:$true] %s37
      %43 = dma.hbm_to_vmem [thread:$0]  %s36, 256, %s38, [#allocation7], 128, 128, 8
    $region9: #{tpu_custom_call.1} parent=1 // pred_fallthru
      _
    // Predicated region
    $region10: #{tpu_custom_call.1} parent=1 // pred_check
      _
    $region11: #{tpu_custom_call.1} parent=1 // pred_check_branch
      %45 = sbr.rel (0) target = $region13
    $region12: #{tpu_custom_call.1} parent=1 // pred_region
      %47 = dma.done [#allocation4], 256
    $region13: #{tpu_custom_call.1} parent=1 // pred_fallthru
      _
    // Predicated region
    $region14: #{tpu_custom_call.1} parent=1 // pred_check
      _
    $region15: #{tpu_custom_call.1} parent=1 // pred_check_branch
      %49 = sbr.rel (0) target = $region17
    $region16: #{tpu_custom_call.1} parent=1 // pred_region
      %51 = dma.done [#allocation7], 256
    $region17: #{tpu_custom_call.1} parent=1 // pred_fallthru
      _
    %s52 = sadd.s32 0, 0
    %s53 = smul.u32 2, %s52
    %s54 = sadd.s32 0, 0
    %s55 = smul.u32 2, %s54
    %p56 = scmp.eq.s32.totalorder 0, 0
    // Predicated region
    $region18: #{tpu_custom_call.1} parent=1 // pred_check
      %p57 = pneg %p56
    $region19: #{tpu_custom_call.1} parent=1 // pred_check_branch
      %59 = sbr.rel (%p57) target = $region21
    $region20: #{tpu_custom_call.1} parent=1 // pred_region
      %60 = vst [vmem:[#allocation2] sm:$0xff] 0.0
    $region21: #{tpu_custom_call.1} parent=1 // pred_fallthru
      _
    %v61 = vld [vmem:[#allocation3] sm:$0xff]
    %v62 = vld [vmem:[#allocation3 + $0x8] sm:$0xff]
    %v63 = vld [vmem:[#allocation6] sm:$0xff]
    %v64 = vld [vmem:[#allocation6 + $0x8] sm:$0xff]
    %v65 = vand.u32 2147483647, %v61
    %v66 = vand.u32 2147483647, %v62
    %v67 = vsub.f32 0.0, %v65
    %v68 = vsub.f32 0.0, %v66
    %v69 = vmul.f32 %v67, 1.442695
    %v70 = vpow.pop %v69
    %v71 = vmul.f32 %v68, 1.442695
    %v72 = vpow.pop %v71
    %v73 = vmax.f32 %v61, 0.0
    %v74 = vmax.f32 %v62, 0.0
    %v75 = vmul.f32 %v61, %v63
    %v76 = vmul.f32 %v62, %v64
    %v77 = vsub.f32 %v73, %v75
    %v78 = vsub.f32 %v74, %v76
    %v79 = vadd.f32 %v70, 1.0
    %v80 = vlog2.pop %v79
    %v81 = vmul.f32 %v80, 0.6931472
    %v82 = vmul.f32 -0.5, %v70
    %v83 = vadd.f32 %v82, 1.0
    %v84 = vmul.f32 %v83, %v70
    %v85 = vand.u32 2147483647, %v70
    %vm86 = vcmp.lt.f32.partialorder %v85, 0.0004427343
    %v87 = vsel %vm86, %v84, %v81
    %v88 = vadd.f32 %v72, 1.0
    %v89 = vlog2.pop %v88
    %v90 = vmul.f32 %v89, 0.6931472
    %v91 = vmul.f32 -0.5, %v72
    %v92 = vadd.f32 %v91, 1.0
    %v93 = vmul.f32 %v92, %v72
    %v94 = vand.u32 2147483647, %v72
    %vm95 = vcmp.lt.f32.partialorder %v94, 0.0004427343
    %v96 = vsel %vm95, %v93, %v90
    %v97 = vadd.f32 %v77, %v87
    %v98 = vadd.f32 %v78, %v96
    %v99 = vadd.f32 %v70, 1.0
    %v100 = vadd.f32 %v72, 1.0
    %v101 = vrcp.pop %v99
    %v102 = vmul.f32 %v99, %v101
    %v103 = vsub.f32 1.0, %v102
    %v104 = vmul.f32 %v101, %v103
    %v105 = vadd.f32 %v101, %v104
    %vm106 = vweird.f32 %v99
    %vm107 = vweird.f32 %v101
    %vm108 = vmor %vm106, %vm107
    %v109 = vsel %vm108, %v101, %v105
    %v110 = vand.u32 2147483647, %v99
    %vm111 = vcmp.eq.f32.partialorder %v110, 8.507059e+37
    %v112 = vand.u32 %v99, 2147483648
    %v113 = vor.u32 1.1754944e-38, %v112
    %v114 = vsel %vm111, %v113, %v109
    %v115 = vmul.f32 1.0, %v114
    %v116 = vrcp.pop %v100
    %v117 = vmul.f32 %v100, %v116
    %v118 = vsub.f32 1.0, %v117
    %v119 = vmul.f32 %v116, %v118
    %v120 = vadd.f32 %v116, %v119
    %vm121 = vweird.f32 %v100
    %vm122 = vweird.f32 %v116
    %vm123 = vmor %vm121, %vm122
    %v124 = vsel %vm123, %v116, %v120
    %v125 = vand.u32 2147483647, %v100
    %vm126 = vcmp.eq.f32.partialorder %v125, 8.507059e+37
    %v127 = vand.u32 %v100, 2147483648
    %v128 = vor.u32 1.1754944e-38, %v127
    %v129 = vsel %vm126, %v128, %v124
    %v130 = vmul.f32 1.0, %v129
    %vm131 = vcmp.ge.f32.partialorder %v61, 0.0
    %vm132 = vcmp.ge.f32.partialorder %v62, 0.0
    %v133 = vmul.f32 %v70, %v115
    %v134 = vmul.f32 %v72, %v130
    %v135 = vsel %vm131, %v115, %v133
    %v136 = vsel %vm132, %v130, %v134
    %v137 = vmul.f32 %v63, 0.25
    %v138 = vmul.f32 %v64, 0.25
    %v139 = vsub.f32 1.0, %v63
    %v140 = vsub.f32 1.0, %v64
    %v141 = vmul.f32 %v139, 0.75
    %v142 = vmul.f32 %v140, 0.75
    %v143 = vadd.f32 %v137, %v141
    %v144 = vadd.f32 %v138, %v142
    %v145 = vsub.f32 %v63, %v135
    %v146 = vsub.f32 %v64, %v136
    %v147 = vand.u32 2147483647, %v145
    %v148 = vand.u32 2147483647, %v146
    %v149 = vrsqrt.pop %v147
    %v150 = vmul.f32 %v149, %v147
    %v151 = vmul.f32 %v150, %v149
    %v152 = vmul.f32 0.5, %v151
    %v153 = vsub.f32 1.5, %v152
    %v154 = vmul.f32 %v149, %v153
    %v155 = vmul.f32 %v147, %v154
    %vm156 = vcmp.eq.f32.partialorder %v147, inf
    %v157 = vsel %vm156, %v147, %v155
    %vm158 = vcmp.eq.f32.partialorder %v147, 0.0
    %v159 = vand.u32 %v147, 2147483648
    %v160 = vsel %vm158, %v159, %v157
    %v161 = vrsqrt.pop %v148
    %v162 = vmul.f32 %v161, %v148
    %v163 = vmul.f32 %v162, %v161
    %v164 = vmul.f32 0.5, %v163
    %v165 = vsub.f32 1.5, %v164
    %v166 = vmul.f32 %v161, %v165
    %v167 = vmul.f32 %v148, %v166
    %vm168 = vcmp.eq.f32.partialorder %v148, inf
    %v169 = vsel %vm168, %v148, %v167
    %vm170 = vcmp.eq.f32.partialorder %v148, 0.0
    %v171 = vand.u32 %v148, 2147483648
    %v172 = vsel %vm170, %v171, %v169
    %v173 = vmul.f32 %v147, %v160
    %v174 = vmul.f32 %v148, %v172
    %v175 = vmul.f32 %v97, %v143
    %v176 = vmul.f32 %v98, %v144
    %v177 = vmul.f32 %v175, %v173
    %v178 = vmul.f32 %v176, %v174
    %v179 = vld [vmem:[#allocation2] sm:$0xff]
    %v180 = vadd.f32 %v177, %v178
    %v181 = vadd.f32 %v179, %v180
    %182 = vst [vmem:[#allocation2] sm:$0xff] %v181
    // Predicated region
    $region22: #{tpu_custom_call.1} parent=1 // pred_check
      %p183 = pneg %p56
    $region23: #{tpu_custom_call.1} parent=1 // pred_check_branch
      %185 = sbr.rel (%p183) target = $region25
    $region24: #{tpu_custom_call.1} parent=1 // pred_region
      %v186 = vld [vmem:[#allocation2] sm:$0xff]
      %187 = vst [vmem:[#allocation8] sm:$0xff] %v186
    $region25: #{tpu_custom_call.1} parent=1 // pred_fallthru
      _
    // Predicated region
    $region26: #{tpu_custom_call.1} parent=1 // pred_check
      _
    $region27: #{tpu_custom_call.1} parent=1 // pred_check_branch
      %189 = sbr.rel (0) target = $region29
    $region28: #{tpu_custom_call.1} parent=1 // pred_region
      %191 = vsyncadd [#allocation5], 0
      %s193 = sshll.u32 [#allocation8], 4
      %s194 = int_to_ptr.vmem [resolvable:$true] %s193
      %s195 = sshll.u32 %s2, 4
      %s196 = int_to_ptr.hbm [resolvable:$true] %s195
      %198 = dma.vmem_to_hbm [thread:$0]  %s194, 128, %s196, [#allocation5]
    $region29: #{tpu_custom_call.1} parent=1 // pred_fallthru
      _
    // Predicated region
    $region30: #{tpu_custom_call.1} parent=1 // pred_check
      _
    $region31: #{tpu_custom_call.1} parent=1 // pred_check_branch
      %200 = sbr.rel (0) target = $region33
    $region32: #{tpu_custom_call.1} parent=1 // pred_region
      %202 = dma.done [#allocation5], 128
    $region33: #{tpu_custom_call.1} parent=1 // pred_fallthru
      _
    %203 = vsyncpa [#allocation4], 1
    %204 = vsyncpa [#allocation7], 1
    %205 = vsyncpa [#allocation5], 1

</llo_original>
